<compile_context>
chip_gen: v5e
topology: v5e:2x2
jax: 0.10.0
libtpu: 0.0.40
codegen_flags: <defaults>
</compile_context>

<pallas_src>
import functools

import jax
import jax.numpy as jnp
from jax import lax
from jax.experimental import pallas as pl
from jax.experimental.pallas import tpu as pltpu


# ----------------------------------------------------------------------------
# Kernel 1: tiled matmul  y = x @ w (+ bias), f32 output accumulated in place.
# ----------------------------------------------------------------------------
def _matmul_kernel(x_ref, w_ref, o_ref):
    @pl.when(pl.program_id(2) == 0)
    def _():
        o_ref[...] = jnp.zeros(o_ref.shape, o_ref.dtype)

    # bf16 MXU feed, f32 accumulation directly into the resident output block.
    o_ref[...] += jnp.dot(x_ref[...].astype(jnp.bfloat16),
                          w_ref[...].astype(jnp.bfloat16),
                          preferred_element_type=jnp.float32)


def _matmul_bias_kernel(x_ref, w_ref, b_ref, o_ref):
    @pl.when(pl.program_id(2) == 0)
    def _():
        o_ref[...] = jnp.zeros(o_ref.shape, o_ref.dtype)

    o_ref[...] += jnp.dot(x_ref[...].astype(jnp.bfloat16),
                          w_ref[...].astype(jnp.bfloat16),
                          preferred_element_type=jnp.float32)

    @pl.when(pl.program_id(2) == pl.num_programs(2) - 1)
    def _():
        o_ref[...] += b_ref[...].astype(jnp.float32)


def linear(x, w_t, bias=None, *, tm=256, tn=256, tk=1024):
    """x: (M, K), w_t: (K, N) [bf16 or f32], bias: (1, N) or None -> (M, N) f32."""
    M, K = x.shape
    Kw, N = w_t.shape
    assert K == Kw

    # Shrink tiles for small problems (full-dim blocks are always legal);
    # ragged M/N edges handled by cdiv grid + masked edge stores (no jnp.pad).
    tm = min(tm, M)
    tn = min(tn, N)
    # K tiling must divide K exactly (accumulation correctness); else one step.
    tk_sel = K
    for cand in (tk, tk // 2, tk // 4, tk // 8):
        if cand >= 128 and K % cand == 0:
            tk_sel = cand
            break
    tk = tk_sel

    grid = (pl.cdiv(M, tm), pl.cdiv(N, tn), K // tk)
    x_spec = pl.BlockSpec((tm, tk), lambda i, j, k: (i, k))
    w_spec = pl.BlockSpec((tk, tn), lambda i, j, k: (k, j))
    o_spec = pl.BlockSpec((tm, tn), lambda i, j, k: (i, j))

    if bias is None:
        kernel, in_specs, args = _matmul_kernel, [x_spec, w_spec], (x, w_t)
    else:
        b2d = bias if bias.ndim == 2 else bias.reshape(1, N)
        kernel = _matmul_bias_kernel
        in_specs = [x_spec, w_spec, pl.BlockSpec((1, tn), lambda i, j, k: (0, j))]
        args = (x, w_t, b2d)

    return pl.pallas_call(
        kernel,
        out_shape=jax.ShapeDtypeStruct((M, N), jnp.float32),
        grid_spec=pltpu.PrefetchScalarGridSpec(
            num_scalar_prefetch=0,
            grid=grid,
            in_specs=in_specs,
            out_specs=o_spec),
        compiler_params=pltpu.CompilerParams(
            dimension_semantics=("parallel", "parallel", "arbitrary"),
            vmem_limit_bytes=32 * 1024 * 1024),
    )(*args)


# ----------------------------------------------------------------------------
# Kernel 2: flash-attention core over the fused QKV buffer, head-group grid.
# ----------------------------------------------------------------------------
def _head_grouping(heads, dim_head):
    """Heads per group so that group width (hpg*dim_head) is 128-lane aligned."""
    if dim_head % 128 == 0:
        return 1
    if 128 % dim_head == 0:
        hpg = 128 // dim_head
        if heads % hpg == 0:
            return hpg
    return heads


def _flash_attn_kernel(q_ref, k_ref, v_ref, o_ref, m_sc, l_sc, acc_sc, *,
                       hpg, dim_head, mask_kv, tk, n_valid):
    kv = pl.program_id(3)

    @pl.when(kv == 0)
    def _():
        m_sc[...] = jnp.full(m_sc.shape, -jnp.inf, jnp.float32)
        l_sc[...] = jnp.zeros(l_sc.shape, jnp.float32)
        acc_sc[...] = jnp.zeros(acc_sc.shape, jnp.float32)

    # bf16 MXU feed; softmax scale is already folded into the QKV weight.
    q = q_ref[0].astype(jnp.bfloat16)   # (tq, gw)
    k = k_ref[0].astype(jnp.bfloat16)   # (tk, gw)
    v = v_ref[0].astype(jnp.bfloat16)   # (tk, gw)

    if mask_kv:  # traced only when N % tk != 0
        col = kv * tk + lax.broadcasted_iota(jnp.int32, (1, tk), 1)
        kv_ok = col < n_valid            # (1, tk), broadcasts over q rows

    for h in range(hpg):                 # hpg is small (typically 1 or 2)
        lo, hi = h * dim_head, (h + 1) * dim_head
        # q . k^T without an explicit transpose (contract last dims).
        s = lax.dot_general(q[:, lo:hi], k[:, lo:hi],
                            (((1,), (1,)), ((), ())),
                            preferred_element_type=jnp.float32)  # (tq, tk)
        if mask_kv:
            s = jnp.where(kv_ok, s, -1e30)

        m_prev = m_sc[h]                                         # (tq, 1)
        m_new = jnp.maximum(m_prev, jnp.max(s, axis=-1, keepdims=True))
        alpha = jnp.exp(m_prev - m_new)
        p = jnp.exp(s - m_new)
        l_sc[h] = alpha * l_sc[h] + jnp.sum(p, axis=-1, keepdims=True)
        acc_sc[h] = alpha * acc_sc[h] + jnp.dot(
            p.astype(jnp.bfloat16), v[:, lo:hi],
            preferred_element_type=jnp.float32)
        m_sc[h] = m_new

    @pl.when(kv == pl.num_programs(3) - 1)
    def _():
        # Normalization deferred to the last kv step; approx reciprocal on EUP.
        outs = [acc_sc[h] * pl.reciprocal(l_sc[h], approx=True)
                for h in range(hpg)]
        blk = outs[0] if hpg == 1 else jnp.concatenate(outs, axis=-1)
        o_ref[0] = blk.astype(o_ref.dtype)   # lane-dense fused 'b n (h d)' store


def flash_attention(qkv, *, heads, dim_head, tq=128, tk=128):
    """qkv: (B, N, 3*heads*dim_head) -> (B, N, heads*dim_head)."""
    B, N, three_inner = qkv.shape
    inner = heads * dim_head
    assert three_inner == 3 * inner

    hpg = _head_grouping(heads, dim_head)
    gw = hpg * dim_head
    n_groups = heads // hpg

    tq = min(tq, N)
    tk = min(tk, N)
    grid = (B, n_groups, pl.cdiv(N, tq), pl.cdiv(N, tk))
    mask_kv = (N % tk) != 0

    if inner % 128 == 0 and (gw % 128 == 0 or gw == inner):
        # Index q/k/v directly inside the fused QKV buffer (no split, no
        # head transpose, no extra HBM pass).
        inputs = (qkv, qkv, qkv)
        q_spec = pl.BlockSpec((1, tq, gw), lambda b, g, qi, ki: (b, qi, g))
        k_spec = pl.BlockSpec((1, tk, gw), lambda b, g, qi, ki: (b, ki, n_groups + g))
        v_spec = pl.BlockSpec((1, tk, gw), lambda b, g, qi, ki: (b, ki, 2 * n_groups + g))
    else:
        # TODO(synk): fallback when inner is not lane-aligned makes one extra
        # HBM pass to split qkv into contiguous q/k/v slabs.
        hpg, gw, n_groups = heads, inner, 1
        inputs = (qkv[..., :inner], qkv[..., inner:2 * inner], qkv[..., 2 * inner:])
        q_spec = pl.BlockSpec((1, tq, gw), lambda b, g, qi, ki: (b, qi, g))
        k_spec = pl.BlockSpec((1, tk, gw), lambda b, g, qi, ki: (b, ki, g))
        v_spec = pl.BlockSpec((1, tk, gw), lambda b, g, qi, ki: (b, ki, g))

    kernel = functools.partial(
        _flash_attn_kernel, hpg=hpg, dim_head=dim_head,
        mask_kv=mask_kv, tk=tk, n_valid=N)

    return pl.pallas_call(
        kernel,
        out_shape=jax.ShapeDtypeStruct((B, N, inner), qkv.dtype),
        grid_spec=pltpu.PrefetchScalarGridSpec(
            num_scalar_prefetch=0,
            grid=grid,
            in_specs=[q_spec, k_spec, v_spec],
            out_specs=pl.BlockSpec((1, tq, gw), lambda b, g, qi, ki: (b, qi, g)),
            scratch_shapes=[
                pltpu.VMEM((hpg, tq, 1), jnp.float32),         # running max m
                pltpu.VMEM((hpg, tq, 1), jnp.float32),         # running sum l
                pltpu.VMEM((hpg, tq, dim_head), jnp.float32),  # output accumulator
            ]),
        compiler_params=pltpu.CompilerParams(
            dimension_semantics=("parallel", "parallel", "parallel", "arbitrary"),
            vmem_limit_bytes=32 * 1024 * 1024),
    )(*inputs)


# ----------------------------------------------------------------------------
# Module wrapper (glue: reshapes only — no head transposes, no per-call .T/pad)
# ----------------------------------------------------------------------------
class AttentionPallas:
    def __init__(self, dim, heads=8, dim_head=64, dropout=0.0, *, key,
                 dtype=jnp.float32):
        inner_dim = dim_head * heads
        self.heads = heads
        self.dim_head = dim_head
        self.dim = dim
        self.scale = dim_head ** (-0.5)
        self.project_out = not (heads == 1 and dim_head == dim)
        # dropout == 0.0 -> identity at eval; nothing to do.

        k1, k2, k3 = jax.random.split(key, 3)
        # PyTorch nn.Linear weight shape: (out_features, in_features), f32 "master".
        bound_qkv = 1.0 / (dim ** 0.5)
        self.w_qkv = jax.random.uniform(
            k1, (inner_dim * 3, dim), dtype, -bound_qkv, bound_qkv)
        # Kernel-side weights: pre-transposed once at init, softmax scale folded
        # into the q columns (zero runtime cost), stored bf16 to halve the
        # weight DMA and feed the MXU at its bf16 peak (f32 accumulation).
        col_scale = jnp.concatenate([
            jnp.full((inner_dim,), self.scale, dtype),
            jnp.ones((2 * inner_dim,), dtype)])
        self.w_qkv_t_kern = (self.w_qkv.T * col_scale[None, :]).astype(jnp.bfloat16)

        if self.project_out:
            bound_out = 1.0 / (inner_dim ** 0.5)
            self.w_out = jax.random.uniform(
                k2, (dim, inner_dim), dtype, -bound_out, bound_out)
            self.b_out = jax.random.uniform(
                k3, (dim,), dtype, -bound_out, bound_out)
            self.w_out_t_kern = self.w_out.T.astype(jnp.bfloat16)
            self.b_out_kern = self.b_out.reshape(1, dim).astype(jnp.float32)
        else:
            self.w_out = self.b_out = None
            self.w_out_t_kern = self.b_out_kern = None

    def __call__(self, x):
        B, N, D = x.shape
        H, Dh = self.heads, self.dim_head
        inner = H * Dh

        x2d = x.reshape(B * N, D)
        # QKV projection (to_qkv has no bias; scale pre-folded into weights).
        qkv = linear(x2d, self.w_qkv_t_kern)                 # (B*N, 3*inner) f32
        qkv = qkv.reshape(B, N, 3 * inner)

        # Flash attention; output already in fused 'b n (h d)' layout.
        out = flash_attention(qkv, heads=H, dim_head=Dh)

        if self.project_out:
            out2d = linear(out.reshape(B * N, inner),
                           self.w_out_t_kern, self.b_out_kern)
            return out2d.reshape(B, N, D)
        return out


# ----------------------------------------------------------------------------
# Pure-JAX reference (f32 weights, explicit scale) for the correctness check
# ----------------------------------------------------------------------------
def reference_forward(mod, x):
    B, N, D = x.shape
    H, Dh = mod.heads, mod.dim_head
    qkv = x @ mod.w_qkv.T
    q, k, v = jnp.split(qkv, 3, axis=-1)
    to_h = lambda t: t.reshape(B, N, H, Dh).transpose(0, 2, 1, 3)
    q, k, v = to_h(q), to_h(k), to_h(v)
    dots = jnp.einsum('bhnd,bhmd->bhnm', q, k) * mod.scale
    attn = jax.nn.softmax(dots, axis=-1)
    out = jnp.einsum('bhnm,bhmd->bhnd', attn, v)
    out = out.transpose(0, 2, 1, 3).reshape(B, N, H * Dh)
    if mod.project_out:
        out = out @ mod.w_out.T + mod.b_out
    return out


if __name__ == "__main__":
    key = jax.random.PRNGKey(0)
    kx, kp = jax.random.split(key)

    # Small shapes: batch=2, seq=8, dim=32, heads=4, dim_head=64 -> inner=256.
    # This exercises the head-group grid (2 groups of 2 heads, 128-lane blocks)
    # and the fused-QKV fast path.
    B, N, D = 2, 8, 32
    heads, dim_head = 4, 64

    x = jax.random.normal(kx, (B, N, D), jnp.float32)
    mod = AttentionPallas(D, heads=heads, dim_head=dim_head, dropout=0.0, key=kp)

    y = jax.block_until_ready(mod(x))
    y_ref = reference_forward(mod, x)

    assert y.shape == (B, N, D)
    # bf16 MXU feed (with f32 accumulation) -> relaxed tolerance vs f32 reference.
    max_err = float(jnp.max(jnp.abs(y - y_ref)))
    assert jnp.allclose(y, y_ref, atol=2e-2, rtol=2e-2), (
        f"mismatch vs reference: max abs err = {max_err}")

    print("KERNEL_OK")
</pallas_src>

<mosaic_0001>
module attributes {stable_mosaic.version = 11 : i64} {
  func.func @_matmul_kernel(%arg0: i32, %arg1: i32, %arg2: i32, %arg3: memref<16x32xf32, #tpu.memory_space<vmem>>, %arg4: memref<32x256xbf16, #tpu.memory_space<vmem>>, %arg5: memref<16x256xf32, #tpu.memory_space<vmem>>) attributes {dimension_semantics = [#tpu.dimension_semantics<parallel>, #tpu.dimension_semantics<parallel>, #tpu.dimension_semantics<arbitrary>], iteration_bounds = array<i64: 1, 3, 1>, scalar_prefetch = 0 : i64, scratch_operands = 0 : i64, tpu.core_type = #tpu.core_type<tc>, window_params = [{transform_indices = @transform_0, window_bounds = array<i64: 16, 32>}, {transform_indices = @transform_1, window_bounds = array<i64: 32, 256>}, {transform_indices = @transform_2, window_bounds = array<i64: 16, 256>}]} {
    %c0_i32 = arith.constant 0 : i32
    %0 = arith.cmpi eq, %arg2, %c0_i32 : i32
    %1 = arith.extui %0 : i1 to i32
    %c0_i32_0 = arith.constant 0 : i32
    %2 = arith.cmpi ne, %1, %c0_i32_0 : i32
    scf.if %2 {
      %cst_8 = arith.constant 0.000000e+00 : f32
      %10 = vector.broadcast %cst_8 : f32 to vector<16x256xf32>
      %c0_9 = arith.constant 0 : index
      %c0_10 = arith.constant 0 : index
      %11 = vector.load %arg5[%c0_9, %c0_10] : memref<16x256xf32, #tpu.memory_space<vmem>>, vector<16x256xf32>
      tpu.vector_store %arg5[%c0_9, %c0_10], %10 {strides = array<i32>} : memref<16x256xf32, #tpu.memory_space<vmem>>, vector<16x256xf32>,
    } else {
    }
    %c0 = arith.constant 0 : index
    %c0_1 = arith.constant 0 : index
    %3 = vector.load %arg5[%c0, %c0_1] : memref<16x256xf32, #tpu.memory_space<vmem>>, vector<16x256xf32>
    %c0_2 = arith.constant 0 : index
    %c0_3 = arith.constant 0 : index
    %4 = vector.load %arg3[%c0_2, %c0_3] : memref<16x32xf32, #tpu.memory_space<vmem>>, vector<16x32xf32>
    %5 = arith.truncf %4 : vector<16x32xf32> to vector<16x32xbf16>
    %c0_4 = arith.constant 0 : index
    %c0_5 = arith.constant 0 : index
    %6 = vector.load %arg4[%c0_4, %c0_5] : memref<32x256xbf16, #tpu.memory_space<vmem>>, vector<32x256xbf16>
    %cst = arith.constant dense<0.000000e+00> : vector<16x256xf32>
    %7 = tpu.matmul %5, %6, %cst {dimension_numbers = #tpu.dot_dimension_numbers<[1], [0], [0], [1], [0, 0, 1, 1], [], []>} : vector<16x32xbf16>, vector<32x256xbf16>, vector<16x256xf32> -> vector<16x256xf32>
    %8 = arith.addf %3, %7 : vector<16x256xf32>
    %c0_6 = arith.constant 0 : index
    %c0_7 = arith.constant 0 : index
    %9 = vector.load %arg5[%c0_6, %c0_7] : memref<16x256xf32, #tpu.memory_space<vmem>>, vector<16x256xf32>
    tpu.vector_store %arg5[%c0_6, %c0_7], %8 {strides = array<i32>} : memref<16x256xf32, #tpu.memory_space<vmem>>, vector<16x256xf32>,
    return
  }
  func.func @transform_0(%arg0: i32, %arg1: i32, %arg2: i32) -> (i32, i32) {
    %c0_i32 = arith.constant 0 : i32
    return %arg0, %arg2 : i32, i32
  }
  func.func @transform_1(%arg0: i32, %arg1: i32, %arg2: i32) -> (i32, i32) {
    %c0_i32 = arith.constant 0 : i32
    return %arg2, %arg1 : i32, i32
  }
  func.func @transform_2(%arg0: i32, %arg1: i32, %arg2: i32) -> (i32, i32) {
    %c0_i32 = arith.constant 0 : i32
    return %arg0, %arg1 : i32, i32
  }
}

</mosaic_0001>

<llo_original>
// kernel: tpu_custom_call.1
$region0: #{tpu_custom_call.1}
  #allocation0 [shape = 'u32[]', space=smem, size = 0x4, offset = 0x4, fixed_abs, tag = 'smem constant byte address 0x4 - core index']
  #allocation1 [shape = 'u32[72,128]{1,0:T(1,128)}', space=vmem, size = 0x9000, scoped, tag = 'internal scratch']
  %s0 = inlined_call_operand.hbm [shape: f32[16,32], index: 0, kind: input, shape index: {}]
  %s1 = inlined_call_operand.hbm [shape: bf16[32,768], index: 1, kind: input, shape index: {}]
  %s2 = inlined_call_operand.hbm [shape: f32[16,768], index: 2, kind: output, shape index: {}]
  %s3 = sld [smem:[#allocation0]]
  $region53: #{tpu_custom_call.1} parent=0
    _
  %s5 = ssub.s32 1, %s3
  %s6 = scalar_select 0, %s5, %s3
  $region1: #{tpu_custom_call.1} parent=0
    #allocation2 [shape = 'u8[8192]{0}', space=vmem, size = 0x2000, scoped, tag = 'input window, operand 0, single buffered']
    #allocation3 [shape = 's32[2]{0}', space=sflag, size = 0x8, scoped, tag = 'scoped memory for tpu_custom_call.1']
    #allocation4 [shape = 's32[2]{0}', space=sflag, size = 0x8, scoped, tag = 'scoped memory for tpu_custom_call.1']
    #allocation5 [shape = 'u8[32768]{0}', space=vmem, size = 0x8000, scoped, tag = 'input window, operand 1']
    #allocation6 [shape = 's32[2]{0}', space=sflag, size = 0x8, scoped, tag = 'scoped memory for tpu_custom_call.1']
    #allocation7 [shape = 'u8[32768]{0}', space=vmem, size = 0x8000, scoped, tag = 'output window, operand 0']
    %7 = vsyncpa [#allocation3], 0
    %8 = vsyncpa [#allocation6], 0
    %s9 = scalar_lea.sflag [#allocation6], 1
    %10 = vsyncpa %s9, 0
    %11 = vsyncpa [#allocation4], 0
    %s12 = scalar_lea.sflag [#allocation4], 1
    %13 = vsyncpa %s12, 0
    loop: start=0, step=1, limit=5
    $region2: #{tpu_custom_call.1} parent=1 // loop_pre_header
      _
    $region3: #{tpu_custom_call.1} parent=1 // loop_header
      %s15 = sphi 0, %s19
      %p16 = scmp.ge.s32.totalorder %s15, 5
      %s22 = sphi 0, %s41
      %s23 = sphi 0, %s37
      %s24 = sphi 0, %s33
      %s25 = sphi 0, %s22
      %s26 = sphi 0, %s23
      %s27 = sphi 0, %s24
      %s28 = sphi 0, %s25
      %s29 = sphi 0, %s26
      %s30 = sphi 0, %s27
      %s46 = sphi 0, %s48
      %s49 = sphi 0, %s46
      %s50 = sphi 0, %s49
      %s66 = sphi 0, %s50
      %s74 = sphi 0, %s76
      %s77 = sphi 0, %s74
      %s78 = sphi 0, %s77
      %s94 = sphi 0, %s78
      %s102 = sphi 0, %s104
      %s105 = sphi 0, %s102
      %s106 = sphi 0, %s105
      %s122 = sphi 0, %s106
    $region4: #{tpu_custom_call.1} parent=1 // loop_header_branch
      %18 = sbr.rel (%p16) target = $region8
    $region5: #{tpu_custom_call.1} parent=1 // loop_body
      %s20 = ssub.s32 %s15, 1
      %s21 = ssub.s32 %s15, 2
      %s31 = sadd.s32 1, %s24
      %p32 = scmp.ge.s32.totalorder %s31, 1
      %s33 = scalar_select %p32, 0, %s31
      %s34 = sadd.s32 1, %s23
      %s35 = scalar_select %p32, %s34, %s23
      %p36 = scmp.ge.s32.totalorder %s35, 3
      %s37 = scalar_select %p36, 0, %s35
      %s38 = sadd.s32 1, %s22
      %s39 = scalar_select %p36, %s38, %s22
      %p40 = scmp.ge.s32.totalorder %s39, 1
      %s41 = scalar_select %p40, 0, %s39
      %s42 = ssub.s32 %s22, %s41
      %s43 = ssub.s32 %s24, %s33
      %s44 = sor.u32 %s42, %s43
      %p45 = scmp.eq.s32.totalorder %s44, 0
      %s47 = sadd.s32 %s46, 1
      %s48 = scalar_select %p45, %s46, %s47
      %p51 = pneg %p45
      %p52 = scmp.eq.s32.totalorder %s15, 2
      %p53 = por %p51, %p52
      %p54 = scmp.ne.s32.totalorder %s46, %s49
      %p55 = scmp.eq.s32.totalorder %s15, 0
      %p56 = por %p54, %p55
      %p57 = scmp.ne.s32.totalorder %s46, %s49
      %p58 = scmp.eq.s32.totalorder %s20, 2
      %p59 = por %p57, %p58
      %p60 = scmp.ne.s32.totalorder %s49, %s50
      %p61 = scmp.eq.s32.totalorder %s20, 0
      %p62 = por %p60, %p61
      %p63 = scmp.ne.s32.totalorder %s49, %s50
      %p64 = scmp.eq.s32.totalorder %s21, 2
      %p65 = por %p63, %p64
      %p67 = scmp.ne.s32.totalorder %s50, %s66
      %p68 = scmp.eq.s32.totalorder %s21, 0
      %p69 = por %p67, %p68
      %s70 = ssub.s32 %s24, %s33
      %s71 = ssub.s32 %s23, %s37
      %s72 = sor.u32 %s70, %s71
      %p73 = scmp.eq.s32.totalorder %s72, 0
      %s75 = sadd.s32 %s74, 1
      %s76 = scalar_select %p73, %s74, %s75
      %p79 = pneg %p73
      %p80 = scmp.eq.s32.totalorder %s15, 2
      %p81 = por %p79, %p80
      %p82 = scmp.ne.s32.totalorder %s74, %s77
      %p83 = scmp.eq.s32.totalorder %s15, 0
      %p84 = por %p82, %p83
      %p85 = scmp.ne.s32.totalorder %s74, %s77
      %p86 = scmp.eq.s32.totalorder %s20, 2
      %p87 = por %p85, %p86
      %p88 = scmp.ne.s32.totalorder %s77, %s78
      %p89 = scmp.eq.s32.totalorder %s20, 0
      %p90 = por %p88, %p89
      %p91 = scmp.ne.s32.totalorder %s77, %s78
      %p92 = scmp.eq.s32.totalorder %s21, 2
      %p93 = por %p91, %p92
      %p95 = scmp.ne.s32.totalorder %s78, %s94
      %p96 = scmp.eq.s32.totalorder %s21, 0
      %p97 = por %p95, %p96
      %s98 = ssub.s32 %s22, %s41
      %s99 = ssub.s32 %s23, %s37
      %s100 = sor.u32 %s98, %s99
      %p101 = scmp.eq.s32.totalorder %s100, 0
      %s103 = sadd.s32 %s102, 1
      %s104 = scalar_select %p101, %s102, %s103
      %p107 = pneg %p101
      %p108 = scmp.eq.s32.totalorder %s15, 2
      %p109 = por %p107, %p108
      %p110 = scmp.ne.s32.totalorder %s102, %s105
      %p111 = scmp.eq.s32.totalorder %s15, 0
      %p112 = por %p110, %p111
      %p113 = scmp.ne.s32.totalorder %s102, %s105
      %p114 = scmp.eq.s32.totalorder %s20, 2
      %p115 = por %p113, %p114
      %p116 = scmp.ne.s32.totalorder %s105, %s106
      %p117 = scmp.eq.s32.totalorder %s20, 0
      %p118 = por %p116, %p117
      %p119 = scmp.ne.s32.totalorder %s105, %s106
      %p120 = scmp.eq.s32.totalorder %s21, 2
      %p121 = por %p119, %p120
      %p123 = scmp.ne.s32.totalorder %s106, %s122
      %p124 = scmp.eq.s32.totalorder %s21, 0
      %p125 = por %p123, %p124
      %p126 = scmp.le.s32.totalorder 1, %s15
      %p127 = scmp.lt.s32.totalorder %s15, 4
      %p128 = pnand %p126, %p127
      %p129 = pneg %p128
      // Predicated region
      $region9: #{tpu_custom_call.1} parent=5 // pred_check
        _
      $region10: #{tpu_custom_call.1} parent=5 // pred_check_branch
        %131 = sbr.rel (%p128) target = $region12
      $region11: #{tpu_custom_call.1} parent=5 // pred_region
        %s132 = ssub.s32 %s15, 1
        // Predicated region
        $region13: #{tpu_custom_call.1} parent=11 // pred_check
          %p133 = pneg %p62
        $region14: #{tpu_custom_call.1} parent=11 // pred_check_branch
          %135 = sbr.rel (%p133) target = $region16
        $region15: #{tpu_custom_call.1} parent=11 // pred_region
          %s136 = smul.u32 2, %s25
          %138 = vsyncadd [#allocation3], 0
          %s139 = sadd.s32 %s27, %s136
          %s140 = smul.addr %s139, 8
          %s141 = scalar_lea.hbm %s0, %s140
          %s142 = sshll.u32 %s141, 4
          %s143 = int_to_ptr.hbm [resolvable:$true] %s142
          %s144 = sshll.u32 [#allocation2], 4
          %s145 = int_to_ptr.vmem [resolvable:$true] %s144
          %150 = dma.hbm_to_vmem [thread:$0]  %s143, 256, %s145, [#allocation3], 128, 128, 8
        $region16: #{tpu_custom_call.1} parent=11 // pred_fallthru
          _
      $region12: #{tpu_custom_call.1} parent=5 // pred_fallthru
        _
      %p151 = scmp.lt.s32.totalorder %s15, 3
      // Predicated region
      $region17: #{tpu_custom_call.1} parent=5 // pred_check
        %p152 = pneg %p151
      $region18: #{tpu_custom_call.1} parent=5 // pred_check_branch
        %154 = sbr.rel (%p152) target = $region20
      $region19: #{tpu_custom_call.1} parent=5 // pred_region
        // Predicated region
        $region21: #{tpu_custom_call.1} parent=19 // pred_check
          %p155 = pneg %p84
        $region22: #{tpu_custom_call.1} parent=19 // pred_check_branch
          %157 = sbr.rel (%p155) target = $region24
        $region23: #{tpu_custom_call.1} parent=19 // pred_region
          %s158 = sand.u32 %s74, 1
          %s159 = scalar_lea.sflag [#allocation6], %s158
          %s160 = sand.u32 %s74, 1
          %s161 = smul.addr %s160, 32
          %s162 = scalar_lea.vmem [#allocation5], %s161
          %s163 = smul.u32 4, %s24
          %s164 = smul.u32 2, %s23
          %166 = vsyncadd %s159, 0
          %s167 = smul.addr %s163, 6
          %s168 = sadd.s32 %s164, %s167
          %s169 = smul.addr %s168, 4
          %s170 = scalar_lea.hbm %s1, %s169
          %s171 = sshll.u32 %s170, 4
          %s172 = int_to_ptr.hbm [resolvable:$true] %s171
          %s173 = sshll.u32 %s162, 4
          %s174 = int_to_ptr.vmem [resolvable:$true] %s173
          %179 = dma.hbm_to_vmem [thread:$0]  %s172, 512, %s174, %s159, 384, 128, 8
        $region24: #{tpu_custom_call.1} parent=19 // pred_fallthru
          _
      $region20: #{tpu_custom_call.1} parent=5 // pred_fallthru
        _
      %p180 = scmp.le.s32.totalorder 1, %s15
      %p181 = scmp.lt.s32.totalorder %s15, 4
      %p182 = pnand %p180, %p181
      %p183 = pneg %p182
      // Predicated region
      $region25: #{tpu_custom_call.1} parent=5 // pred_check
        _
      $region26: #{tpu_custom_call.1} parent=5 // pred_check_branch
        %185 = sbr.rel (%p182) target = $region28
      $region27: #{tpu_custom_call.1} parent=5 // pred_region
        %s186 = ssub.s32 %s15, 1
        // Predicated region
        $region29: #{tpu_custom_call.1} parent=27 // pred_check
          %p187 = pneg %p62
        $region30: #{tpu_custom_call.1} parent=27 // pred_check_branch
          %189 = sbr.rel (%p187) target = $region32
        $region31: #{tpu_custom_call.1} parent=27 // pred_region
          %191 = dma.done [#allocation3], 256
        $region32: #{tpu_custom_call.1} parent=27 // pred_fallthru
          _
        %s192 = sand.u32 %s77, 1
        %s193 = scalar_lea.sflag [#allocation6], %s192
        %s194 = sand.u32 %s77, 1
        %s195 = smul.addr %s194, 32
        %s196 = scalar_lea.vmem [#allocation5], %s195
        // Predicated region
        $region33: #{tpu_custom_call.1} parent=27 // pred_check
          %p197 = pneg %p90
        $region34: #{tpu_custom_call.1} parent=27 // pred_check_branch
          %199 = sbr.rel (%p197) target = $region36
        $region35: #{tpu_custom_call.1} parent=27 // pred_region
          %201 = dma.done %s193, 512
        $region36: #{tpu_custom_call.1} parent=27 // pred_fallthru
          _
        %p202 = pneg %p62
        %p203 = pneg %p59
        %s204 = sand.u32 %s77, 1
        %s205 = scalar_lea.sflag [#allocation6], %s204
        %s206 = sand.u32 %s77, 1
        %s207 = smul.addr %s206, 32
        %s208 = scalar_lea.vmem [#allocation5], %s207
        %p209 = pneg %p90
        %p210 = pneg %p87
        %p211 = pneg %p118
        %p212 = pneg %p115
        %s213 = sand.u32 %s105, 1
        %s214 = scalar_lea.sflag [#allocation4], %s213
        %s215 = sand.u32 %s105, 1
        %s216 = smul.addr %s215, 32
        %s217 = scalar_lea.vmem [#allocation7], %s216
        %s218 = smul.u32 2, %s25
        %s219 = smul.u32 4, %s27
        %s220 = smul.u32 2, %s26
        %s221 = smul.u32 2, %s25
        %s222 = smul.u32 2, %s26
        %p224 = scmp.eq.s32.totalorder %s27, 0
        // Predicated region
        $region37: #{tpu_custom_call.1} parent=27 // pred_check
          %p225 = pneg %p224
        $region38: #{tpu_custom_call.1} parent=27 // pred_check_branch
          %227 = sbr.rel (%p225) target = $region40
        $region39: #{tpu_custom_call.1} parent=27 // pred_region
          %228 = vst [vmem:[%s217] sm:$0xff] 0.0
          %229 = vst [vmem:[%s217 + $0x8] sm:$0xff] 0.0
          %230 = vst [vmem:[%s217 + $0x10] sm:$0xff] 0.0
          %231 = vst [vmem:[%s217 + $0x18] sm:$0xff] 0.0
        $region40: #{tpu_custom_call.1} parent=27 // pred_fallthru
          _
        %v232 = vld [vmem:[%s217] sm:$0xff]
        %v233 = vld [vmem:[%s217 + $0x8] sm:$0xff]
        %v234 = vld [vmem:[%s217 + $0x10] sm:$0xff]
        %v235 = vld [vmem:[%s217 + $0x18] sm:$0xff]
        %v236 = vld [vmem:[#allocation2] sm:$0xff]
        %v237 = vld [vmem:[#allocation2 + $0x8] sm:$0xff]
        %v238 = vpack.c.bf16 %v237, %v236
        %v239 = vld [vmem:[%s196] sm:$0xff]
        %v240 = vld [vmem:[%s196 + $0x8] sm:$0xff]
        %v241 = vld [vmem:[%s196 + $0x10] sm:$0xff]
        %v242 = vld [vmem:[%s196 + $0x18] sm:$0xff]
        %v247 = vunpack.c.l.b16 %v239
        %v248 = vunpack.c.h.b16 %v239
        %v249 = vunpack.c.l.b16 %v240
        %v250 = vunpack.c.h.b16 %v240
        %v251 = vunpack.c.l.b16 %v241
        %v252 = vunpack.c.h.b16 %v241
        %v253 = vunpack.c.l.b16 %v242
        %v254 = vunpack.c.h.b16 %v242
        %v255 = vpack.c.b16 %v249, %v247
        %v256 = vpack.c.b16 %v250, %v248
        %v257 = vpack.c.b16 %v253, %v251
        %v258 = vpack.c.b16 %v254, %v252
        %vm263 = vcmask 261120
        %v265 = vsel %vm263, %v238, 0
        %267 = vmatpush.bf16.msra.mxu0 0
        %268 = vmatpush.bf16.msra.mxu0 0
        %269 = vmatpush.bf16.msra.mxu0 0
        %270 = vmatpush.bf16.msra.mxu0 0
        %271 = vmatpush.bf16.msra.mxu0 0
        %272 = vmatpush.bf16.msra.mxu0 0
        %273 = vmatpush.bf16.msra.mxu0 %v257
        %274 = vmatpush.bf16.msra.mxu0 %v255
        %275 = vmatmul.bf16.gmra.mxu0 %v265
        %v276 = vpop.f32.mrf.mxu0
        %v277 = vadd.f32 0.0, %v276
        %v278 = vpop.f32.mrf.mxu0
        %v279 = vadd.f32 0.0, %v278
        %280 = vdwg.mxu0
        %281 = vmatpush.bf16.msra.mxu0 0
        %282 = vmatpush.bf16.msra.mxu0 0
        %283 = vmatpush.bf16.msra.mxu0 0
        %284 = vmatpush.bf16.msra.mxu0 0
        %285 = vmatpush.bf16.msra.mxu0 0
        %286 = vmatpush.bf16.msra.mxu0 0
        %287 = vmatpush.bf16.msra.mxu0 %v258
        %288 = vmatpush.bf16.msra.mxu0 %v256
        %289 = vmatmul.bf16.gmra.mxu0 %v265
        %v290 = vpop.f32.mrf.mxu0
        %v291 = vadd.f32 0.0, %v290
        %v292 = vpop.f32.mrf.mxu0
        %v293 = vadd.f32 0.0, %v292
        %294 = vdwg.mxu0
        %v295 = vadd.f32 %v232, %v277
        %v296 = vadd.f32 %v233, %v291
        %v297 = vadd.f32 %v234, %v279
        %v298 = vadd.f32 %v235, %v293
        %299 = vst [vmem:[%s217] sm:$0xff] %v295
        %300 = vst [vmem:[%s217 + $0x8] sm:$0xff] %v296
        %301 = vst [vmem:[%s217 + $0x10] sm:$0xff] %v297
        %302 = vst [vmem:[%s217 + $0x18] sm:$0xff] %v298
        %s303 = sand.u32 %s105, 1
        %s304 = scalar_lea.sflag [#allocation4], %s303
        %s305 = sand.u32 %s105, 1
        %s306 = smul.addr %s305, 32
        %s307 = scalar_lea.vmem [#allocation7], %s306
        // Predicated region
        $region41: #{tpu_custom_call.1} parent=27 // pred_check
          %p308 = pneg %p115
        $region42: #{tpu_custom_call.1} parent=27 // pred_check_branch
          %310 = sbr.rel (%p308) target = $region44
        $region43: #{tpu_custom_call.1} parent=27 // pred_region
          %s311 = smul.u32 2, %s25
          %s312 = smul.u32 2, %s26
          %314 = vsyncadd %s304, 0
          %s315 = smul.addr %s311, 6
          %s316 = sadd.s32 %s312, %s315
          %s317 = smul.addr %s316, 8
          %s318 = scalar_lea.hbm %s2, %s317
          %s319 = sshll.u32 %s307, 4
          %s320 = int_to_ptr.vmem [resolvable:$true] %s319
          %s321 = sshll.u32 %s318, 4
          %s322 = int_to_ptr.hbm [resolvable:$true] %s321
          %327 = dma.vmem_to_hbm [thread:$0]  %s320, 512, %s322, %s304, 256, 768, 16
        $region44: #{tpu_custom_call.1} parent=27 // pred_fallthru
          _
      $region28: #{tpu_custom_call.1} parent=5 // pred_fallthru
        _
      %p328 = scmp.le.s32.totalorder 2, %s15
      // Predicated region
      $region45: #{tpu_custom_call.1} parent=5 // pred_check
        %p329 = pneg %p328
      $region46: #{tpu_custom_call.1} parent=5 // pred_check_branch
        %331 = sbr.rel (%p329) target = $region48
      $region47: #{tpu_custom_call.1} parent=5 // pred_region
        %s332 = ssub.s32 %s15, 2
        // Predicated region
        $region49: #{tpu_custom_call.1} parent=47 // pred_check
          %p333 = pneg %p121
        $region50: #{tpu_custom_call.1} parent=47 // pred_check_branch
          %335 = sbr.rel (%p333) target = $region52
        $region51: #{tpu_custom_call.1} parent=47 // pred_region
          %s336 = sand.u32 %s106, 1
          %s337 = scalar_lea.sflag [#allocation4], %s336
          %s338 = sand.u32 %s106, 1
          %s339 = smul.addr %s338, 32
          %s340 = scalar_lea.vmem [#allocation7], %s339
          %342 = dma.done %s337, 512
        $region52: #{tpu_custom_call.1} parent=47 // pred_fallthru
          _
      $region48: #{tpu_custom_call.1} parent=5 // pred_fallthru
        _
    $region6: #{tpu_custom_call.1} parent=1 // loop_footer
      %s19 = sadd.s32 1, %s15
    $region7: #{tpu_custom_call.1} parent=1 // loop_footer_branch
      %14 = sbr.rel target = $region3
    $region8: #{tpu_custom_call.1} parent=1 // loop_exit
      _
    %343 = vsyncpa [#allocation3], 1
    %s344 = scalar_lea.sflag [#allocation3], 1
    %345 = vsyncpa %s344, 1
    %346 = vsyncpa [#allocation6], 1
    %s347 = scalar_lea.sflag [#allocation6], 1
    %348 = vsyncpa %s347, 1
    %349 = vsyncpa [#allocation4], 1
    %s350 = scalar_lea.sflag [#allocation4], 1
    %351 = vsyncpa %s350, 1

</llo_original>
